<compile_context>
chip_gen: v5e
topology: v5e:2x2
jax: 0.10.0
libtpu: 0.0.40
codegen_flags: <defaults>
</compile_context>

<pallas_src>
import functools

import jax
import jax.numpy as jnp
from jax import lax
from jax.experimental import pallas as pl
from jax.experimental.pallas import tpu as pltpu


def _cdiv(a, b):
    return (a + b - 1) // b


def _round_up(v, m):
    return ((v + m - 1) // m) * m


def _static_pow(u, gamma):
    """u ** gamma with static gamma; integer gamma -> VPU multiplies only."""
    g = float(gamma)
    if g == int(g) and g >= 0:
        gi = int(g)
        if gi == 0:
            return jnp.ones_like(u)
        result = None
        base = u
        while gi:
            if gi & 1:
                result = base if result is None else result * base
            gi >>= 1
            if gi:
                base = base * base
        return result
    # Non-integer gamma: u >= 0 here (u is p or 1-p), so jnp.power is safe.
    # TODO(synk): guard d/du u^gamma at u=0 if a custom VJP is ever added.
    return jnp.power(u, jnp.float32(g))


def _focal_loss_kernel(x_ref, y_ref, o_ref, *, num_classes, alpha, gamma):
    """One row tile.

    x_ref: [TN, D]  logits (rows x classes), contiguous DMA from the natural [N, D] layout.
    y_ref: [1, TN]  int32 labels in [0, num_classes] (num_classes == background).
    o_ref: [1, TN]  f32 per-row focal loss (lane-dense output).
    """
    tn, d = x_ref.shape
    d_out = _round_up(d, 8)          # sublane-aligned class axis for the transposed tile

    # ---- Transpose the tile to class-major [d_out, TN] on the (idle) MXU. -------------
    # xt[c, r] = sum_k eye[c, k] * x[r, k] = x[r, c].  Two bf16 identity matmuls on a
    # hi/lo split of x keep full f32 fidelity; extra rows (c >= d) come out exactly 0.
    x_raw = x_ref[...]
    ri = lax.broadcasted_iota(jnp.int32, (d_out, d), 0)
    ci = lax.broadcasted_iota(jnp.int32, (d_out, d), 1)
    eye = jnp.where(ri == ci, 1.0, 0.0).astype(jnp.bfloat16)
    dims = (((1,), (1,)), ((), ()))   # contract both minor (class) dims: "NT" matmul

    hi = x_raw.astype(jnp.bfloat16)
    xt = lax.dot_general(eye, hi, dims, preferred_element_type=jnp.float32)
    if x_raw.dtype != jnp.bfloat16:
        lo = (x_raw.astype(jnp.float32) - hi.astype(jnp.float32)).astype(jnp.bfloat16)
        xt = xt + lax.dot_general(eye, lo, dims, preferred_element_type=jnp.float32)
    # xt: [d_out, TN] f32, classes on sublanes / rows on lanes.

    y = y_ref[...]                                               # [1, TN] int32
    cls = lax.broadcasted_iota(jnp.int32, (d_out, tn), 0)
    valid = cls < num_classes                                    # in-kernel column masking

    # Stable softmax / logsumexp over the class (sublane) axis.  Row-wise quantities
    # are [1, TN], so the reciprocal and log run once per row, not per element.
    m = jnp.max(jnp.where(valid, xt, -jnp.inf), axis=0, keepdims=True)   # [1, TN]
    xm = xt - m                                                  # hoisted; reused below
    e = jnp.where(valid, jnp.exp(xm), 0.0)
    s = jnp.sum(e, axis=0, keepdims=True)                        # [1, TN], >= 1 on real rows
    inv_s = 1.0 / s                                              # per-row (D-fold cheaper than e / s)
    log_s = jnp.log(s)
    p = e * inv_s                                                # softmax; exactly 0 on invalid classes
    log_p = xm - log_s                                           # finite log-softmax
    l1p = jnp.log(1.0 + p)                                       # == log1p(p) to ~1e-7 abs for p in [0, 1]

    # t in {0,1} collapse of pt / w / bce (no dense t, pt, w temporaries):
    pos = alpha * _static_pow(1.0 - p, gamma) * (l1p - log_p)          # t == 1
    neg = (1.0 - alpha) * _static_pow(p, gamma) * l1p                  # t == 0 (0 on invalid cols: p == 0)
    is_pos = jnp.logical_and(valid, cls == y)

    o_ref[...] = jnp.sum(jnp.where(is_pos, pos, neg), axis=0, keepdims=True)   # [1, TN]


def focal_loss(x, y, *, num_classes=20, alpha=0.25, gamma=2, row_tile=8192):
    """Per-row focal loss, shape [N], float32.

    x: [N, D] float logits (D >= num_classes; extra columns ignored), f32 or bf16.
    y: [N] integer labels in [0, num_classes] (num_classes == background / all-zero target).
    row_tile: rows (lanes) per grid step; sweep 4096-16384 per TPU generation.
    """
    n, d = x.shape
    if d < num_classes:
        raise ValueError(f"x has {d} columns, need >= num_classes={num_classes}")
    y2 = y.astype(jnp.int32).reshape(1, n)                       # lane-dense labels (cheap reshape)

    # Row (lane) tile: multiple of 128 (or the full row count when N <= 128).  No wrapper
    # pad -- the last block may be partial: lanes are independent and OOB stores dropped.
    # Large tiles amortize the ~0.35 us/step overhead, but keep >= ~4 steps when N is big
    # so v7x's two TensorCores stay balanced and DMA/compute overlap has depth.
    row_tile = _round_up(max(int(row_tile), 128), 128)
    if n <= 128:
        tn = n
    else:
        n_ceil = _round_up(n, 128)
        tn = min(row_tile, n_ceil)
        if n_ceil >= 4 * 2048:
            tn = min(tn, max(2048, _round_up(_cdiv(n_ceil, 4), 128)))
    grid = (_cdiv(n, tn),)

    kernel = functools.partial(
        _focal_loss_kernel,
        num_classes=int(num_classes),
        alpha=float(alpha),
        gamma=gamma,
    )

    # Advisory cost so XLA schedules neighbors around the custom call sensibly.
    cost = pl.CostEstimate(
        flops=2 * n * d * _round_up(d, 8) + 16 * n * d,
        transcendentals=2 * n * d + 2 * n,
        bytes_accessed=n * d * int(x.dtype.itemsize) + 4 * n + 4 * n,
    )

    out = pl.pallas_call(
        kernel,
        out_shape=jax.ShapeDtypeStruct((1, n), jnp.float32),
        grid_spec=pl.GridSpec(
            grid=grid,
            in_specs=[
                pl.BlockSpec((tn, d), lambda i: (i, 0)),     # contiguous row tile, full D
                pl.BlockSpec((1, tn), lambda i: (0, i)),     # labels
            ],
            out_specs=pl.BlockSpec((1, tn), lambda i: (0, i)),   # lane-dense loss row
        ),
        compiler_params=pltpu.CompilerParams(
            dimension_semantics=("parallel",),               # megacore sharding on v7x
            vmem_limit_bytes=32 * 1024 * 1024,               # lane-padded (TN, D) bufs exceed v5e's 16 MiB default
        ),
        cost_estimate=cost,
    )(x, y2)
    return out[0]


def _focal_loss_ref(x, y, *, num_classes=20, alpha=0.25, gamma=2):
    """Pure-JAX reference mirroring the PyTorch forward (sanity check)."""
    t_full = jnp.eye(num_classes + 1, dtype=jnp.float32)[y]
    t = t_full[:, :num_classes]
    xc = x[:, :num_classes].astype(jnp.float32)
    p = jax.nn.softmax(xc, axis=-1)
    pt = p * t + (1 - p) * (1 - t)
    w = alpha * t + (1 - alpha) * (1 - t)
    w = w * (1 - pt) ** gamma
    z = jnp.log(p)
    bce = jnp.maximum(z, 0.0) - z * t + jnp.log1p(jnp.exp(-jnp.abs(z)))
    return jnp.sum(w * bce, axis=-1)


if __name__ == "__main__":
    num_classes = 20
    alpha, gamma = 0.25, 2

    key = jax.random.PRNGKey(0)
    kx, ky, kx2, ky2 = jax.random.split(key, 4)

    # Small shape implied by the module: x [N, D] with D = num_classes + 1, y in [0, num_classes].
    N, D = 8, num_classes + 1
    x = jax.random.normal(kx, (N, D), dtype=jnp.float32)
    y = jax.random.randint(ky, (N,), 0, num_classes + 1, dtype=jnp.int32)

    out = jax.block_until_ready(
        focal_loss(x, y, num_classes=num_classes, alpha=alpha, gamma=gamma))
    ref = _focal_loss_ref(x, y, num_classes=num_classes, alpha=alpha, gamma=gamma)
    assert out.shape == (N,)
    assert jnp.allclose(out, ref, atol=1e-4, rtol=1e-4), (out, ref)

    # Second shape exercising the un-padded partial last block path (N not a multiple of 128).
    N2 = 300
    x2 = jax.random.normal(kx2, (N2, D), dtype=jnp.float32)
    y2 = jax.random.randint(ky2, (N2,), 0, num_classes + 1, dtype=jnp.int32)
    out2 = jax.block_until_ready(
        focal_loss(x2, y2, num_classes=num_classes, alpha=alpha, gamma=gamma))
    ref2 = _focal_loss_ref(x2, y2, num_classes=num_classes, alpha=alpha, gamma=gamma)
    assert out2.shape == (N2,)
    assert jnp.allclose(out2, ref2, atol=1e-4, rtol=1e-4), (out2, ref2)

    print("KERNEL_OK")
</pallas_src>

<mosaic_0001>
module attributes {stable_mosaic.version = 11 : i64} {
  func.func @_focal_loss_kernel(%arg0: i32, %arg1: memref<8x21xf32, #tpu.memory_space<vmem>>, %arg2: memref<1x8xi32, #tpu.memory_space<vmem>>, %arg3: memref<1x8xf32, #tpu.memory_space<vmem>>) attributes {dimension_semantics = [#tpu.dimension_semantics<parallel>], iteration_bounds = array<i64: 1>, scalar_prefetch = 0 : i64, scratch_operands = 0 : i64, tpu.core_type = #tpu.core_type<tc>, window_params = [{transform_indices = @transform_0, window_bounds = array<i64: 8, 21>}, {transform_indices = @transform_1, window_bounds = array<i64: 1, 8>}, {transform_indices = @transform_2, window_bounds = array<i64: 1, 8>}]} {
    %c0 = arith.constant 0 : index
    %c0_0 = arith.constant 0 : index
    %0 = vector.load %arg1[%c0, %c0_0] : memref<8x21xf32, #tpu.memory_space<vmem>>, vector<8x21xf32>
    %1 = tpu.iota {dimensions = array<i32: 0>} : vector<24x21xi32>
    %2 = tpu.iota {dimensions = array<i32: 1>} : vector<24x21xi32>
    %3 = arith.cmpi eq, %1, %2 : vector<24x21xi32>
    %cst = arith.constant 1.000000e+00 : f32
    %cst_1 = arith.constant 0.000000e+00 : f32
    %4 = vector.broadcast %cst : f32 to vector<24x21xf32>
    %5 = vector.broadcast %cst_1 : f32 to vector<24x21xf32>
    %6 = arith.select %3, %4, %5 : vector<24x21xi1>, vector<24x21xf32>
    %7 = arith.truncf %6 : vector<24x21xf32> to vector<24x21xbf16>
    %8 = arith.truncf %0 : vector<8x21xf32> to vector<8x21xbf16>
    %cst_2 = arith.constant dense<0.000000e+00> : vector<24x8xf32>
    %9 = tpu.matmul %7, %8, %cst_2 {dimension_numbers = #tpu.dot_dimension_numbers<[1], [1], [0], [0], [0, 0, 1, 0], [], []>} : vector<24x21xbf16>, vector<8x21xbf16>, vector<24x8xf32> -> vector<24x8xf32>
    %10 = arith.extf %8 : vector<8x21xbf16> to vector<8x21xf32>
    %11 = arith.subf %0, %10 : vector<8x21xf32>
    %12 = arith.truncf %11 : vector<8x21xf32> to vector<8x21xbf16>
    %cst_3 = arith.constant dense<0.000000e+00> : vector<24x8xf32>
    %13 = tpu.matmul %7, %12, %cst_3 {dimension_numbers = #tpu.dot_dimension_numbers<[1], [1], [0], [0], [0, 0, 1, 0], [], []>} : vector<24x21xbf16>, vector<8x21xbf16>, vector<24x8xf32> -> vector<24x8xf32>
    %14 = arith.addf %9, %13 : vector<24x8xf32>
    %c0_4 = arith.constant 0 : index
    %c0_5 = arith.constant 0 : index
    %15 = vector.load %arg2[%c0_4, %c0_5] : memref<1x8xi32, #tpu.memory_space<vmem>>, vector<1x8xi32>
    %16 = tpu.iota {dimensions = array<i32: 0>} : vector<24x8xi32>
    %c20_i32 = arith.constant 20 : i32
    %17 = vector.broadcast %c20_i32 : i32 to vector<24x8xi32>
    %18 = arith.cmpi slt, %16, %17 : vector<24x8xi32>
    %cst_6 = arith.constant 0xFF800000 : f32
    %19 = vector.broadcast %cst_6 : f32 to vector<24x8xf32>
    %20 = arith.select %18, %14, %19 : vector<24x8xi1>, vector<24x8xf32>
    %cst_7 = arith.constant dense<0xFF800000> : vector<8xf32>
    %21 = vector.multi_reduction <maximumf>, %20, %cst_7 [0] : vector<24x8xf32> to vector<8xf32>
    %22 = vector.shape_cast %21 : vector<8xf32> to vector<1x8xf32>
    %23 = vector.broadcast %22 : vector<1x8xf32> to vector<24x8xf32>
    %24 = arith.subf %14, %23 : vector<24x8xf32>
    %25 = math.exp %24 : vector<24x8xf32>
    %cst_8 = arith.constant 0.000000e+00 : f32
    %26 = vector.broadcast %cst_8 : f32 to vector<24x8xf32>
    %27 = arith.select %18, %25, %26 : vector<24x8xi1>, vector<24x8xf32>
    %cst_9 = arith.constant dense<0.000000e+00> : vector<8xf32>
    %28 = vector.multi_reduction <add>, %27, %cst_9 [0] : vector<24x8xf32> to vector<8xf32>
    %29 = vector.shape_cast %28 : vector<8xf32> to vector<1x8xf32>
    %cst_10 = arith.constant 1.000000e+00 : f32
    %30 = vector.broadcast %cst_10 : f32 to vector<1x8xf32>
    %31 = arith.divf %30, %29 : vector<1x8xf32>
    %32 = math.log %29 : vector<1x8xf32>
    %33 = vector.broadcast %31 : vector<1x8xf32> to vector<24x8xf32>
    %34 = arith.mulf %27, %33 : vector<24x8xf32>
    %35 = vector.broadcast %32 : vector<1x8xf32> to vector<24x8xf32>
    %36 = arith.subf %24, %35 : vector<24x8xf32>
    %cst_11 = arith.constant 1.000000e+00 : f32
    %37 = vector.broadcast %cst_11 : f32 to vector<24x8xf32>
    %38 = arith.addf %37, %34 : vector<24x8xf32>
    %39 = math.log %38 : vector<24x8xf32>
    %cst_12 = arith.constant 1.000000e+00 : f32
    %40 = vector.broadcast %cst_12 : f32 to vector<24x8xf32>
    %41 = arith.subf %40, %34 : vector<24x8xf32>
    %42 = arith.mulf %41, %41 : vector<24x8xf32>
    %cst_13 = arith.constant 2.500000e-01 : f32
    %43 = vector.broadcast %cst_13 : f32 to vector<24x8xf32>
    %44 = arith.mulf %43, %42 : vector<24x8xf32>
    %45 = arith.subf %39, %36 : vector<24x8xf32>
    %46 = arith.mulf %44, %45 : vector<24x8xf32>
    %47 = arith.mulf %34, %34 : vector<24x8xf32>
    %cst_14 = arith.constant 7.500000e-01 : f32
    %48 = vector.broadcast %cst_14 : f32 to vector<24x8xf32>
    %49 = arith.mulf %48, %47 : vector<24x8xf32>
    %50 = arith.mulf %49, %39 : vector<24x8xf32>
    %51 = vector.broadcast %15 : vector<1x8xi32> to vector<24x8xi32>
    %52 = arith.cmpi eq, %16, %51 : vector<24x8xi32>
    %53 = arith.andi %18, %52 : vector<24x8xi1>
    %54 = arith.select %53, %46, %50 : vector<24x8xi1>, vector<24x8xf32>
    %cst_15 = arith.constant dense<0.000000e+00> : vector<8xf32>
    %55 = vector.multi_reduction <add>, %54, %cst_15 [0] : vector<24x8xf32> to vector<8xf32>
    %56 = vector.shape_cast %55 : vector<8xf32> to vector<1x8xf32>
    %c0_16 = arith.constant 0 : index
    %c0_17 = arith.constant 0 : index
    %57 = vector.load %arg3[%c0_16, %c0_17] : memref<1x8xf32, #tpu.memory_space<vmem>>, vector<1x8xf32>
    tpu.vector_store %arg3[%c0_16, %c0_17], %56 {strides = array<i32>} : memref<1x8xf32, #tpu.memory_space<vmem>>, vector<1x8xf32>,
    return
  }
  func.func @transform_0(%arg0: i32) -> (i32, i32) {
    %c0_i32 = arith.constant 0 : i32
    %c0_i32_0 = arith.constant 0 : i32
    return %arg0, %c0_i32 : i32, i32
  }
  func.func @transform_1(%arg0: i32) -> (i32, i32) {
    %c0_i32 = arith.constant 0 : i32
    %c0_i32_0 = arith.constant 0 : i32
    return %c0_i32, %arg0 : i32, i32
  }
  func.func @transform_2(%arg0: i32) -> (i32, i32) {
    %c0_i32 = arith.constant 0 : i32
    %c0_i32_0 = arith.constant 0 : i32
    return %c0_i32, %arg0 : i32, i32
  }
}

</mosaic_0001>

<llo_original>
// kernel: tpu_custom_call.1
$region0: #{tpu_custom_call.1}
  #allocation0 [shape = 'u32[]', space=smem, size = 0x4, offset = 0x4, fixed_abs, tag = 'smem constant byte address 0x4 - core index']
  #allocation1 [shape = 'u32[72,128]{1,0:T(1,128)}', space=vmem, size = 0x9000, scoped, tag = 'internal scratch']
  %s0 = inlined_call_operand.hbm [shape: f32[8,21], index: 0, kind: input, shape index: {}]
  %s1 = inlined_call_operand.hbm [shape: s32[1,8], index: 1, kind: input, shape index: {}]
  %s2 = inlined_call_operand.hbm [shape: f32[1,8], index: 2, kind: output, shape index: {}]
  %s3 = sld [smem:[#allocation0]]
  $region26: #{tpu_custom_call.1} parent=0
    _
  %s5 = ssub.s32 1, %s3
  %s6 = scalar_select 0, %s5, %s3
  $region1: #{tpu_custom_call.1} parent=0
    #allocation2 [shape = 'u8[4096]{0}', space=vmem, size = 0x1000, scoped, tag = 'input window, operand 0, single buffered']
    #allocation3 [shape = 's32[1]{0}', space=sflag, size = 0x4, scoped, tag = 'scoped memory for tpu_custom_call.1']
    #allocation4 [shape = 's32[1]{0}', space=sflag, size = 0x4, scoped, tag = 'scoped memory for tpu_custom_call.1']
    #allocation5 [shape = 'u8[512]{0}', space=vmem, size = 0x400, scoped, tag = 'input window, operand 1, single buffered']
    #allocation6 [shape = 's32[1]{0}', space=sflag, size = 0x4, scoped, tag = 'scoped memory for tpu_custom_call.1']
    #allocation7 [shape = 'u8[512]{0}', space=vmem, size = 0x400, scoped, tag = 'output window, operand 0, single buffered']
    %7 = vsyncpa [#allocation3], 0
    %8 = vsyncpa [#allocation6], 0
    %9 = vsyncpa [#allocation4], 0
    // Predicated region
    $region2: #{tpu_custom_call.1} parent=1 // pred_check
      _
    $region3: #{tpu_custom_call.1} parent=1 // pred_check_branch
      %11 = sbr.rel (0) target = $region5
    $region4: #{tpu_custom_call.1} parent=1 // pred_region
      %13 = vsyncadd [#allocation3], 0
      %s15 = sshll.u32 %s0, 4
      %s16 = int_to_ptr.hbm [resolvable:$true] %s15
      %s17 = sshll.u32 [#allocation2], 4
      %s18 = int_to_ptr.vmem [resolvable:$true] %s17
      %20 = dma.hbm_to_vmem [thread:$0]  %s16, 128, %s18, [#allocation3]
    $region5: #{tpu_custom_call.1} parent=1 // pred_fallthru
      _
    // Predicated region
    $region6: #{tpu_custom_call.1} parent=1 // pred_check
      _
    $region7: #{tpu_custom_call.1} parent=1 // pred_check_branch
      %22 = sbr.rel (0) target = $region9
    $region8: #{tpu_custom_call.1} parent=1 // pred_region
      %24 = vsyncadd [#allocation6], 0
      %s26 = sshll.u32 %s1, 4
      %s27 = int_to_ptr.hbm [resolvable:$true] %s26
      %s28 = sshll.u32 [#allocation5], 4
      %s29 = int_to_ptr.vmem [resolvable:$true] %s28
      %31 = dma.hbm_to_vmem [thread:$0]  %s27, 16, %s29, [#allocation6]
    $region9: #{tpu_custom_call.1} parent=1 // pred_fallthru
      _
    // Predicated region
    $region10: #{tpu_custom_call.1} parent=1 // pred_check
      _
    $region11: #{tpu_custom_call.1} parent=1 // pred_check_branch
      %33 = sbr.rel (0) target = $region13
    $region12: #{tpu_custom_call.1} parent=1 // pred_region
      %35 = dma.done [#allocation3], 128
    $region13: #{tpu_custom_call.1} parent=1 // pred_fallthru
      _
    // Predicated region
    $region14: #{tpu_custom_call.1} parent=1 // pred_check
      _
    $region15: #{tpu_custom_call.1} parent=1 // pred_check_branch
      %37 = sbr.rel (0) target = $region17
    $region16: #{tpu_custom_call.1} parent=1 // pred_region
      %39 = dma.done [#allocation6], 16
    $region17: #{tpu_custom_call.1} parent=1 // pred_fallthru
      _
    %v41 = vld [vmem:[#allocation2] sm:$0xff]
    %v42 = vlaneseq
    %v43 = vshrl.u32 %v42, 7
    %v44 = vadd.s32 %v43, 8
    %v45 = vadd.s32 %v43, 16
    %v46 = vlaneseq
    %v47 = vand.u32 %v46, 127
    %vm48 = vcmp.eq.s32.totalorder %v43, %v47
    %vm49 = vcmp.eq.s32.totalorder %v44, %v47
    %vm50 = vcmp.eq.s32.totalorder %v45, %v47
    %v51 = vsel %vm48, 1.0, 0.0
    %v52 = vsel %vm49, 1.0, 0.0
    %v53 = vsel %vm50, 1.0, 0.0
    %v54 = vpack.c.bf16 %v52, %v51
    %v55 = vpack.c.bf16 %v53, %v53
    %v56 = vpack.c.bf16 %v41, %v41
    %v57 = vunpack.c.l.bf16 %v56
    %v58 = vsub.f32 %v41, %v57
    %v59 = vpack.c.bf16 %v58, %v58
    %vm60 = vcmask 171008
    %v62 = vsel %vm60, %v54, 0
    %v65 = vsel %vm60, %v55, 0
    %v68 = vsel %vm60, %v59, 0
    %70 = vmatpush.bf16.xpose.msra.mxu0 0
    %71 = vmatpush.bf16.xpose.msra.mxu0 0
    %72 = vmatpush.bf16.xpose.msra.mxu0 0
    %73 = vmatpush.bf16.xpose.msra.mxu0 0
    %74 = vmatpush.bf16.xpose.msra.mxu0 0
    %75 = vmatpush.bf16.xpose.msra.mxu0 0
    %76 = vmatpush.bf16.xpose.msra.mxu0 0
    %77 = vmatpush.bf16.xpose.msra.mxu0 %v68
    %78 = vmatmul.bf16.gmra.mxu0 %v62
    %v79 = vpop.f32.mrf.mxu0
    %v80 = vadd.f32 0.0, %v79
    %v81 = vpop.f32.mrf.mxu0
    %v82 = vadd.f32 0.0, %v81
    %83 = vmatmul.bf16.gmra.mxu0 %v65
    %v84 = vpop.f32.mrf.mxu0
    %v85 = vadd.f32 0.0, %v84
    %v86 = vpop.f32.mrf.mxu0
    %87 = vdwg.mxu0
    %v89 = vsel %vm60, %v56, 0
    %91 = vmatpush.bf16.xpose.msra.mxu0 0
    %92 = vmatpush.bf16.xpose.msra.mxu0 0
    %93 = vmatpush.bf16.xpose.msra.mxu0 0
    %94 = vmatpush.bf16.xpose.msra.mxu0 0
    %95 = vmatpush.bf16.xpose.msra.mxu0 0
    %96 = vmatpush.bf16.xpose.msra.mxu0 0
    %97 = vmatpush.bf16.xpose.msra.mxu0 0
    %98 = vmatpush.bf16.xpose.msra.mxu0 %v89
    %99 = vmatmul.bf16.gmra.mxu0 %v62
    %v100 = vpop.f32.mrf.mxu0
    %v101 = vadd.f32 %v80, %v100
    %v102 = vpop.f32.mrf.mxu0
    %v103 = vadd.f32 %v82, %v102
    %104 = vmatmul.bf16.gmra.mxu0 %v65
    %v105 = vpop.f32.mrf.mxu0
    %v106 = vadd.f32 %v85, %v105
    %v107 = vpop.f32.mrf.mxu0
    %108 = vdwg.mxu0
    %v109 = vld [vmem:[#allocation5] sm:$0x1]
    %vm110 = vcmp.lt.s32.totalorder %v43, 20
    %vm111 = vcmp.lt.s32.totalorder %v44, 20
    %vm112 = vcmp.lt.s32.totalorder %v45, 20
    %v113 = vsel %vm110, %v101, -inf
    %v114 = vsel %vm111, %v103, -inf
    %v115 = vsel %vm112, %v106, -inf
    %vm116 = vcmask 64512
    %v117 = vsel %vm116, %v113, -inf
    %v118 = vsel %vm116, %v114, -inf
    %v119 = vsel %vm116, %v115, -inf
    %v120 = vmax.f32 %v117, %v118
    %v121 = vmax.f32 %v120, %v119
    %v122 = vrot.slane %v121, 4
    %v123 = vmax.f32 %v121, %v122
    %v124 = vrot.slane %v123, 2
    %v125 = vmax.f32 %v123, %v124
    %v126 = vrot.slane %v125, 1
    %v127 = vmax.f32 %v125, %v126
    %v128 = vsub.f32 %v101, %v127
    %v129 = vsub.f32 %v103, %v127
    %v130 = vsub.f32 %v106, %v127
    %v131 = vmul.f32 %v128, 1.442695
    %v132 = vpow.pop %v131
    %v133 = vmul.f32 %v129, 1.442695
    %v134 = vpow.pop %v133
    %v135 = vmul.f32 %v130, 1.442695
    %v136 = vpow.pop %v135
    %v137 = vsel %vm110, %v132, 0.0
    %v138 = vsel %vm111, %v134, 0.0
    %v139 = vsel %vm112, %v136, 0.0
    %v140 = vsel %vm116, %v137, 0.0
    %v141 = vsel %vm116, %v138, 0.0
    %v142 = vadd.f32 %v140, %v141
    %v143 = vsel %vm116, %v139, 0.0
    %v144 = vadd.f32 %v142, %v143
    %v145 = vrot.slane %v144, 4
    %v146 = vadd.f32 %v144, %v145
    %v147 = vrot.slane %v146, 2
    %v148 = vadd.f32 %v146, %v147
    %v149 = vrot.slane %v148, 1
    %v150 = vadd.f32 %v148, %v149
    %v151 = vrcp.pop %v150
    %v152 = vmul.f32 %v150, %v151
    %v153 = vsub.f32 1.0, %v152
    %v154 = vmul.f32 %v151, %v153
    %v155 = vadd.f32 %v151, %v154
    %vm156 = vweird.f32 %v150
    %vm157 = vweird.f32 %v151
    %vm158 = vmor %vm156, %vm157
    %v159 = vsel %vm158, %v151, %v155
    %v160 = vand.u32 2147483647, %v150
    %vm161 = vcmp.eq.f32.partialorder %v160, 8.507059e+37
    %v162 = vand.u32 %v150, 2147483648
    %v163 = vor.u32 1.1754944e-38, %v162
    %v164 = vsel %vm161, %v163, %v159
    %v165 = vmul.f32 1.0, %v164
    %v166 = vlog2.pop %v150
    %v167 = vmul.f32 %v166, 0.6931472
    %v168 = vmul.f32 %v137, %v165
    %v169 = vmul.f32 %v138, %v165
    %v170 = vmul.f32 %v139, %v165
    %v171 = vsub.f32 %v128, %v167
    %v172 = vsub.f32 %v129, %v167
    %v173 = vsub.f32 %v130, %v167
    %v174 = vadd.f32 %v168, 1.0
    %v175 = vadd.f32 %v169, 1.0
    %v176 = vadd.f32 %v170, 1.0
    %v177 = vlog2.pop %v174
    %v178 = vmul.f32 %v177, 0.6931472
    %v179 = vlog2.pop %v175
    %v180 = vmul.f32 %v179, 0.6931472
    %v181 = vlog2.pop %v176
    %v182 = vmul.f32 %v181, 0.6931472
    %v183 = vsub.f32 1.0, %v168
    %v184 = vsub.f32 1.0, %v169
    %v185 = vsub.f32 1.0, %v170
    %v186 = vmul.f32 %v183, %v183
    %v187 = vmul.f32 %v184, %v184
    %v188 = vmul.f32 %v185, %v185
    %v189 = vmul.f32 %v186, 0.25
    %v190 = vmul.f32 %v187, 0.25
    %v191 = vmul.f32 %v188, 0.25
    %v192 = vsub.f32 %v178, %v171
    %v193 = vsub.f32 %v180, %v172
    %v194 = vsub.f32 %v182, %v173
    %v195 = vmul.f32 %v189, %v192
    %v196 = vmul.f32 %v190, %v193
    %v197 = vmul.f32 %v191, %v194
    %v198 = vmul.f32 %v168, %v168
    %v199 = vmul.f32 %v169, %v169
    %v200 = vmul.f32 %v170, %v170
    %v201 = vmul.f32 %v198, 0.75
    %v202 = vmul.f32 %v199, 0.75
    %v203 = vmul.f32 %v200, 0.75
    %v204 = vmul.f32 %v201, %v178
    %v205 = vmul.f32 %v202, %v180
    %v206 = vmul.f32 %v203, %v182
    %v207 = vperm.slane %v109, 0
    %vm208 = vcmp.eq.s32.totalorder %v43, %v207
    %vm209 = vcmp.eq.s32.totalorder %v44, %v207
    %vm210 = vcmp.eq.s32.totalorder %v45, %v207
    %vm211 = vmand %vm110, %vm208
    %vm212 = vmand %vm111, %vm209
    %vm213 = vmand %vm112, %vm210
    %v214 = vsel %vm211, %v195, %v204
    %v215 = vsel %vm212, %v196, %v205
    %v216 = vsel %vm213, %v197, %v206
    %v217 = vsel %vm116, %v214, 0.0
    %v218 = vsel %vm116, %v215, 0.0
    %v219 = vadd.f32 %v217, %v218
    %v220 = vsel %vm116, %v216, 0.0
    %v221 = vadd.f32 %v219, %v220
    %v222 = vrot.slane %v221, 4
    %v223 = vadd.f32 %v221, %v222
    %v224 = vrot.slane %v223, 2
    %v225 = vadd.f32 %v223, %v224
    %v226 = vrot.slane %v225, 1
    %v227 = vadd.f32 %v225, %v226
    %vm228 = vcmask 57344
    %229 = vst.msk [vmem:[#allocation7] sm:$0x1] %vm228, %v227
    // Predicated region
    $region18: #{tpu_custom_call.1} parent=1 // pred_check
      _
    $region19: #{tpu_custom_call.1} parent=1 // pred_check_branch
      %231 = sbr.rel (0) target = $region21
    $region20: #{tpu_custom_call.1} parent=1 // pred_region
      %233 = vsyncadd [#allocation4], 0
      %s235 = sshll.u32 [#allocation7], 4
      %s236 = int_to_ptr.vmem [resolvable:$true] %s235
      %s237 = sshll.u32 %s2, 4
      %s238 = int_to_ptr.hbm [resolvable:$true] %s237
      %240 = dma.vmem_to_hbm [thread:$0]  %s236, 16, %s238, [#allocation4]
    $region21: #{tpu_custom_call.1} parent=1 // pred_fallthru
      _
    // Predicated region
    $region22: #{tpu_custom_call.1} parent=1 // pred_check
      _
    $region23: #{tpu_custom_call.1} parent=1 // pred_check_branch
      %242 = sbr.rel (0) target = $region25
    $region24: #{tpu_custom_call.1} parent=1 // pred_region
      %244 = dma.done [#allocation4], 16
    $region25: #{tpu_custom_call.1} parent=1 // pred_fallthru
      _
    %245 = vsyncpa [#allocation3], 1
    %246 = vsyncpa [#allocation6], 1
    %247 = vsyncpa [#allocation4], 1

</llo_original>
